<compile_context>
chip_gen: v7x
topology: tpu7x:2x2x1
jax: 0.10.0
libtpu: 0.0.40
codegen_flags: <defaults>
</compile_context>

<pallas_src>
import jax
import jax.numpy as jnp
from jax import lax
from jax.experimental import pallas as pl
from jax.experimental.pallas import tpu as pltpu


_VMEM_BUDGET_BYTES = 24 * 1024 * 1024   # conservative double-buffer budget (all gens)
_VMEM_LIMIT_BYTES = 32 * 1024 * 1024    # explicit scoped-VMEM limit for the kernel


def _round_up(n, m):
    return ((n + m - 1) // m) * m


def _proto_kernel(x_ref, w_ref, o_ref):
    # x_ref: (tb, D_pad), w_ref: (Kblk, D_pad), o_ref: (tb, Kblk).
    # x @ W.T expressed as a contraction on the shared feature axis (no
    # in-kernel transpose); MXU matmul with f32 accumulation.
    o_ref[...] = lax.dot_general(
        x_ref[...],
        w_ref[...],
        dimension_numbers=(((1,), (1,)), ((), ())),
        preferred_element_type=jnp.float32,
    ).astype(o_ref.dtype)


def _pick_batch_tile(B, per_row_bytes, fixed_bytes, sub):
    """Largest batch tile whose double-buffered footprint fits the VMEM budget."""
    b_cap = _round_up(B, 8)
    for cand in (1024, 512, 256, 128, 64, 32, 16, 8):
        if cand > b_cap:
            continue
        if cand > 8 and cand % sub != 0:   # prefer bf16 sublane packing (16 rows)
            continue
        if fixed_bytes + cand * per_row_bytes <= _VMEM_BUDGET_BYTES:
            return cand
    return 8


@jax.jit
def _multi_prototypes_fused(x, w_all):
    """x: (B, D); w_all: (K_pad, D_pad) fused, padded prototype weights.

    Returns the fused logits (B, K_pad) in float32.
    """
    B, D = x.shape
    K_pad, D_pad = w_all.shape

    # Pad the feature axis only if needed (real SwAV output_dim is typically a
    # multiple of 128 already, in which case this is a no-op -> no extra pass).
    if D != D_pad:
        x = jnp.pad(x, ((0, 0), (0, D_pad - D)))

    x_isz = x.dtype.itemsize
    w_isz = w_all.dtype.itemsize
    o_isz = jnp.dtype(jnp.float32).itemsize
    sub = 16 if x_isz < 4 else 8

    out_shape = jax.ShapeDtypeStruct((B, K_pad), jnp.float32)

    # --- Preferred variant: whole weight matrix VMEM-resident. -----------------
    # W is DMA'd once (constant block index) and reused for every batch tile;
    # the output store is K_pad lanes wide (lane-dense, unmasked).
    resident_fixed = 2 * K_pad * D_pad * w_isz            # count 2x to stay safe
    resident_per_row = 2 * (D_pad * x_isz + K_pad * o_isz)
    if resident_fixed + 8 * resident_per_row <= _VMEM_BUDGET_BYTES:
        tb = _pick_batch_tile(B, resident_per_row, resident_fixed, sub)
        cost = pl.CostEstimate(
            flops=2 * B * K_pad * D_pad,
            transcendentals=0,
            bytes_accessed=B * D_pad * x_isz + K_pad * D_pad * w_isz
            + B * K_pad * o_isz,
        )
        return pl.pallas_call(
            _proto_kernel,
            out_shape=out_shape,
            grid_spec=pl.GridSpec(
                grid=(pl.cdiv(B, tb),),
                in_specs=[
                    pl.BlockSpec((tb, D_pad), lambda i: (i, 0)),
                    pl.BlockSpec((K_pad, D_pad), lambda i: (0, 0)),
                ],
                out_specs=pl.BlockSpec((tb, K_pad), lambda i: (i, 0)),
            ),
            compiler_params=pltpu.CompilerParams(
                dimension_semantics=("parallel",),
                vmem_limit_bytes=_VMEM_LIMIT_BYTES,
            ),
            cost_estimate=cost,
        )(x, w_all)

    # --- Fallback for very large K_pad * D_pad: 2-D (batch, prototype) grid. ---
    # K innermost so the x tile (constant index across j) stays VMEM-resident
    # across the inner sweep.
    tk = next(t for t in (512, 256, 128) if K_pad % t == 0)
    fb_fixed = 2 * tk * D_pad * w_isz
    fb_per_row = 2 * (D_pad * x_isz + tk * o_isz)
    tb = _pick_batch_tile(B, fb_per_row, fb_fixed, sub)
    grid = (pl.cdiv(B, tb), K_pad // tk)
    cost = pl.CostEstimate(
        flops=2 * B * K_pad * D_pad,
        transcendentals=0,
        bytes_accessed=B * D_pad * x_isz
        + grid[0] * K_pad * D_pad * w_isz
        + B * K_pad * o_isz,
    )
    return pl.pallas_call(
        _proto_kernel,
        out_shape=out_shape,
        grid_spec=pl.GridSpec(
            grid=grid,
            in_specs=[
                pl.BlockSpec((tb, D_pad), lambda i, j: (i, 0)),
                pl.BlockSpec((tk, D_pad), lambda i, j: (j, 0)),
            ],
            out_specs=pl.BlockSpec((tb, tk), lambda i, j: (i, j)),
        ),
        compiler_params=pltpu.CompilerParams(
            dimension_semantics=("parallel", "parallel"),
            vmem_limit_bytes=_VMEM_LIMIT_BYTES,
        ),
        cost_estimate=cost,
    )(x, w_all)


class MultiPrototypes:
    """JAX/Pallas port of the SwAV MultiPrototypes module (bias-free heads).

    Weights are stored fused (all heads concatenated on the prototype axis),
    zero-padded to 128-multiples, in bfloat16 by default; accumulation and the
    returned outputs are float32.
    """

    def __init__(self, output_dim, nmb_prototypes, key, dtype=jnp.bfloat16):
        self.nmb_heads = len(nmb_prototypes)
        self.head_sizes = tuple(int(k) for k in nmb_prototypes)
        self.output_dim = int(output_dim)
        self.dtype = dtype

        # nn.Linear default init: U(-1/sqrt(fan_in), 1/sqrt(fan_in)), no bias.
        bound = 1.0 / (self.output_dim ** 0.5)
        self.weights = []  # per-head f32 masters (reference / export)
        for k in self.head_sizes:
            key, sub = jax.random.split(key)
            self.weights.append(
                jax.random.uniform(sub, (k, self.output_dim), dtype=jnp.float32,
                                   minval=-bound, maxval=bound))

        # Fuse and pad ONCE at init (never per call): prototype axis -> 128
        # multiple (lane-dense stores), feature axis -> 128 multiple (lane-dense
        # DMAs / clean MXU contraction).  Padding rows/cols are zero -> no
        # effect on the valid outputs.
        self.k_total = sum(self.head_sizes)
        k_pad = _round_up(self.k_total, 128)
        d_pad = _round_up(self.output_dim, 128)
        w_all = jnp.concatenate(self.weights, axis=0)
        w_all = jnp.pad(w_all, ((0, k_pad - self.k_total),
                                (0, d_pad - self.output_dim)))
        self.w_all = w_all.astype(dtype)

    def fused(self, x):
        """Concatenated (B, sum(k_i)) f32 logits — no per-head output copies."""
        out = _multi_prototypes_fused(x.astype(self.dtype), self.w_all)
        return out[:, : self.k_total]

    def __call__(self, x):
        # PyTorch semantics: list of per-head outputs.  The per-head slices are
        # the only extra copies; prefer .fused() when the consumer can take the
        # concatenated logits directly.
        out = _multi_prototypes_fused(x.astype(self.dtype), self.w_all)
        results, off = [], 0
        for k in self.head_sizes:
            results.append(out[:, off:off + k])
            off += k
        return results


if __name__ == "__main__":
    key = jax.random.PRNGKey(0)
    k_x, k_params = jax.random.split(key)

    batch = 8
    output_dim = 32
    nmb_prototypes = [16, 32, 64]

    x = jax.random.normal(k_x, (batch, output_dim), dtype=jnp.float32)

    # Default (bf16 storage, f32 accumulation/output) path.
    module = MultiPrototypes(output_dim, nmb_prototypes, k_params)
    outs = [jax.block_until_ready(o) for o in module(x)]

    # Reference with the same bf16-rounded operands, exact f32 products/accum.
    x_q = x.astype(jnp.bfloat16).astype(jnp.float32)
    for o, w, k in zip(outs, module.weights, nmb_prototypes):
        w_q = w.astype(jnp.bfloat16).astype(jnp.float32)
        r = jnp.dot(x_q, w_q.T, precision=lax.Precision.HIGHEST)
        assert o.shape == (batch, k), (o.shape, (batch, k))
        assert o.dtype == jnp.float32
        assert jnp.allclose(o, r, atol=1e-4, rtol=1e-4), \
            float(jnp.max(jnp.abs(o - r)))

    # f32-storage path (same kernel; in-kernel f32 matmul may use the MXU's
    # default multi/single-pass precision, hence the looser tolerance).
    module_f32 = MultiPrototypes(output_dim, nmb_prototypes, k_params,
                                 dtype=jnp.float32)
    outs32 = [jax.block_until_ready(o) for o in module_f32(x)]
    for o, w, k in zip(outs32, module_f32.weights, nmb_prototypes):
        r = jnp.dot(x, w.T, precision=lax.Precision.HIGHEST)
        assert o.shape == (batch, k)
        assert jnp.allclose(o, r, atol=1e-2, rtol=1e-2)

    print("KERNEL_OK")
</pallas_src>

<mosaic_0001>
module attributes {stable_mosaic.version = 11 : i64} {
  func.func @_proto_kernel(%arg0: i32, %arg1: memref<8x128xbf16, #tpu.memory_space<vmem>>, %arg2: memref<128x128xbf16, #tpu.memory_space<vmem>>, %arg3: memref<8x128xf32, #tpu.memory_space<vmem>>) attributes {dimension_semantics = [#tpu.dimension_semantics<parallel>], iteration_bounds = array<i64: 1>, scalar_prefetch = 0 : i64, scratch_operands = 0 : i64, tpu.core_type = #tpu.core_type<tc>, window_params = [{transform_indices = @transform_0, window_bounds = array<i64: 8, 128>}, {pipeline_mode = #tpu.pipeline_mode<synchronous>, transform_indices = @transform_1, window_bounds = array<i64: 128, 128>}, {transform_indices = @transform_2, window_bounds = array<i64: 8, 128>}]} {
    %c0 = arith.constant 0 : index
    %c0_0 = arith.constant 0 : index
    %0 = vector.load %arg1[%c0, %c0_0] : memref<8x128xbf16, #tpu.memory_space<vmem>>, vector<8x128xbf16>
    %c0_1 = arith.constant 0 : index
    %c0_2 = arith.constant 0 : index
    %1 = vector.load %arg2[%c0_1, %c0_2] : memref<128x128xbf16, #tpu.memory_space<vmem>>, vector<128x128xbf16>
    %cst = arith.constant dense<0.000000e+00> : vector<8x128xf32>
    %2 = tpu.matmul %0, %1, %cst {dimension_numbers = #tpu.dot_dimension_numbers<[1], [1], [0], [0], [0, 0, 1, 0], [], []>} : vector<8x128xbf16>, vector<128x128xbf16>, vector<8x128xf32> -> vector<8x128xf32>
    %c0_3 = arith.constant 0 : index
    %c0_4 = arith.constant 0 : index
    %3 = vector.load %arg3[%c0_3, %c0_4] : memref<8x128xf32, #tpu.memory_space<vmem>>, vector<8x128xf32>
    tpu.vector_store %arg3[%c0_3, %c0_4], %2 {strides = array<i32>} : memref<8x128xf32, #tpu.memory_space<vmem>>, vector<8x128xf32>,
    return
  }
  func.func @transform_0(%arg0: i32) -> (i32, i32) {
    %c0_i32 = arith.constant 0 : i32
    %c0_i32_0 = arith.constant 0 : i32
    return %arg0, %c0_i32 : i32, i32
  }
  func.func @transform_1(%arg0: i32) -> (i32, i32) {
    %c0_i32 = arith.constant 0 : i32
    %c0_i32_0 = arith.constant 0 : i32
    %c0_i32_1 = arith.constant 0 : i32
    return %c0_i32, %c0_i32_0 : i32, i32
  }
  func.func @transform_2(%arg0: i32) -> (i32, i32) {
    %c0_i32 = arith.constant 0 : i32
    %c0_i32_0 = arith.constant 0 : i32
    return %arg0, %c0_i32 : i32, i32
  }
}

</mosaic_0001>

<llo_original>
// kernel: _multi_prototypes_fused.1
$region0: #{_multi_prototypes_fused.1}
  #allocation0 [shape = 'u32[]', space=smem, size = 0x4, offset = 0x4, fixed_abs, tag = 'smem constant byte address 0x4 - core index']
  #allocation1 [shape = 'u32[144,128]{1,0:T(1,128)}', space=vmem, size = 0x12000, scoped, tag = 'internal scratch']
  %s0 = inlined_call_operand.vmem [shape: bf16[8,128], index: 0, kind: input, shape index: {}]
  %s1 = inlined_call_operand.hbm [shape: bf16[128,128], index: 1, kind: input, shape index: {}]
  %s2 = inlined_call_operand.hbm [shape: f32[8,128], index: 2, kind: output, shape index: {}]
  %s3 = sld [smem:[#allocation0]]
  $region22: #{_multi_prototypes_fused.1} parent=0
    _
  %s5 = ssub.s32 1, %s3
  %s6 = scalar_select 0, %s5, %s3
  $region1: #{_multi_prototypes_fused.1} parent=0
    #allocation2 [shape = 'u8[32768]{0}', space=vmem, size = 0x8000, scoped, tag = 'input window, operand 1, single buffered']
    #allocation3 [shape = 's32[1]{0}', space=sflag, size = 0x4, scoped, tag = 'scoped memory for _multi_prototypes_fused.1']
    #allocation4 [shape = 's32[1]{0}', space=sflag, size = 0x4, scoped, tag = 'scoped memory for _multi_prototypes_fused.1']
    #allocation5 [shape = 'u8[4096]{0}', space=vmem, size = 0x1000, scoped, tag = 'output window, operand 0, single buffered']
    %7 = vsyncpa [#allocation3], 0
    %8 = vsyncpa [#allocation4], 0
    // Predicated region
    $region2: #{_multi_prototypes_fused.1} parent=1 // pred_check
      _
    $region3: #{_multi_prototypes_fused.1} parent=1 // pred_check_branch
      %10 = sbr.rel (0) target = $region5
    $region4: #{_multi_prototypes_fused.1} parent=1 // pred_region
      _
    $region5: #{_multi_prototypes_fused.1} parent=1 // pred_fallthru
      _
    // Predicated region
    $region6: #{_multi_prototypes_fused.1} parent=1 // pred_check
      _
    $region7: #{_multi_prototypes_fused.1} parent=1 // pred_check_branch
      %12 = sbr.rel (0) target = $region9
    $region8: #{_multi_prototypes_fused.1} parent=1 // pred_region
      %s14 = ssub.s32 1024, 1024
      %15 = vsyncadd [#allocation3], %s14
      %s16 = sshll.u32 [#allocation2], 4
      %s17 = int_to_ptr.vmem [resolvable:$true] %s16
      %22 = dma.hbm_to_vmem [thread:$0]  %s1, 1024, %s17, [#allocation3], 64, 64, 4
    $region9: #{_multi_prototypes_fused.1} parent=1 // pred_fallthru
      _
    // Predicated region
    $region10: #{_multi_prototypes_fused.1} parent=1 // pred_check
      _
    $region11: #{_multi_prototypes_fused.1} parent=1 // pred_check_branch
      %24 = sbr.rel (0) target = $region13
    $region12: #{_multi_prototypes_fused.1} parent=1 // pred_region
      %25 = dma.done [#allocation3], 1024
    $region13: #{_multi_prototypes_fused.1} parent=1 // pred_fallthru
      _
    %v27 = vld [vmem:[%s0] sm:$0xf]
    %v28 = vld [vmem:[#allocation2] sm:$0xf]
    %v29 = vld [vmem:[#allocation2 + $0x4] sm:$0xf]
    %v30 = vld [vmem:[#allocation2 + $0x8] sm:$0xf]
    %v31 = vld [vmem:[#allocation2 + $0xc] sm:$0xf]
    %v32 = vld [vmem:[#allocation2 + $0x10] sm:$0xf]
    %v33 = vld [vmem:[#allocation2 + $0x14] sm:$0xf]
    %v34 = vld [vmem:[#allocation2 + $0x18] sm:$0xf]
    %v35 = vld [vmem:[#allocation2 + $0x1c] sm:$0xf]
    %v36 = vld [vmem:[#allocation2 + $0x20] sm:$0xf]
    %v37 = vld [vmem:[#allocation2 + $0x24] sm:$0xf]
    %v38 = vld [vmem:[#allocation2 + $0x28] sm:$0xf]
    %v39 = vld [vmem:[#allocation2 + $0x2c] sm:$0xf]
    %v40 = vld [vmem:[#allocation2 + $0x30] sm:$0xf]
    %v41 = vld [vmem:[#allocation2 + $0x34] sm:$0xf]
    %v42 = vld [vmem:[#allocation2 + $0x38] sm:$0xf]
    %v43 = vld [vmem:[#allocation2 + $0x3c] sm:$0xf]
    %v60 = vunpack.c.l.b16 %v28
    %v61 = vunpack.c.l.b16 %v29
    %v62 = vunpack.c.l.b16 %v30
    %v63 = vunpack.c.l.b16 %v31
    %v64 = vunpack.c.l.b16 %v32
    %v65 = vunpack.c.l.b16 %v33
    %v66 = vunpack.c.l.b16 %v34
    %v67 = vunpack.c.l.b16 %v35
    %v68 = vunpack.c.l.b16 %v36
    %v69 = vunpack.c.l.b16 %v37
    %v70 = vunpack.c.l.b16 %v38
    %v71 = vunpack.c.l.b16 %v39
    %v72 = vunpack.c.l.b16 %v40
    %v73 = vunpack.c.l.b16 %v41
    %v74 = vunpack.c.l.b16 %v42
    %v75 = vunpack.c.l.b16 %v43
    %v76 = vpack.c.b16 %v61, %v60
    %v77 = vpack.c.b16 %v63, %v62
    %v78 = vpack.c.b16 %v65, %v64
    %v79 = vpack.c.b16 %v67, %v66
    %v80 = vpack.c.b16 %v69, %v68
    %v81 = vpack.c.b16 %v71, %v70
    %v82 = vpack.c.b16 %v73, %v72
    %v83 = vpack.c.b16 %v75, %v74
    %92 = vmatprep.subr.bf16.mxu0 0
    %93 = vmatpush1.bf16.xpose.msra.mxu0 %v76
    %94 = vmatprep.subr.bf16.mxu0 0
    %95 = vmatpush1.bf16.xpose.msra.mxu0 %v77
    %96 = vmatprep.subr.bf16.mxu0 0
    %97 = vmatpush1.bf16.xpose.msra.mxu0 %v78
    %98 = vmatprep.subr.bf16.mxu0 0
    %99 = vmatpush1.bf16.xpose.msra.mxu0 %v79
    %100 = vmatprep.subr.bf16.mxu0 0
    %101 = vmatpush1.bf16.xpose.msra.mxu0 %v80
    %102 = vmatprep.subr.bf16.mxu0 0
    %103 = vmatpush1.bf16.xpose.msra.mxu0 %v81
    %104 = vmatprep.subr.bf16.mxu0 0
    %105 = vmatpush1.bf16.xpose.msra.mxu0 %v82
    %106 = vmatprep.subr.bf16.mxu0 0
    %107 = vmatpush1.bf16.xpose.msra.mxu0 %v83
    %108 = vmatprep.subr.bf16.mxu0 0
    %109 = vmatpush1.bf16.xpose.msra.mxu0 0
    %110 = vmatprep.subr.bf16.mxu0 0
    %111 = vmatpush1.bf16.xpose.msra.mxu0 0
    %112 = vmatprep.subr.bf16.mxu0 0
    %113 = vmatpush1.bf16.xpose.msra.mxu0 0
    %114 = vmatprep.subr.bf16.mxu0 0
    %115 = vmatpush1.bf16.xpose.msra.mxu0 0
    %116 = vmatprep.subr.bf16.mxu0 0
    %117 = vmatpush1.bf16.xpose.msra.mxu0 0
    %118 = vmatprep.subr.bf16.mxu0 0
    %119 = vmatpush1.bf16.xpose.msra.mxu0 0
    %120 = vmatprep.subr.bf16.mxu0 0
    %121 = vmatpush1.bf16.xpose.msra.mxu0 0
    %122 = vmatprep.subr.bf16.mxu0 0
    %123 = vmatpush1.bf16.xpose.msra.mxu0 0
    %124 = vmatprep.mubr.bf16.mxu0 0
    %125 = vmatmul.mubr.bf16.gmra.mrb[0].mxu0 %v27
    %v126 = vpop.f32.mrb[0].mxu0
    %v127 = vadd.f32 0.0, %v126
    %v128 = vpop.f32.mrb[0].mxu0
    %v129 = vpop.f32.mrb[0].mxu0
    %v130 = vpop.f32.mrb[0].mxu0
    %131 = vdwg.mxu0
    %132 = vst [vmem:[#allocation5] sm:$0xff] %v127
    // Predicated region
    $region14: #{_multi_prototypes_fused.1} parent=1 // pred_check
      _
    $region15: #{_multi_prototypes_fused.1} parent=1 // pred_check_branch
      %134 = sbr.rel (0) target = $region17
    $region16: #{_multi_prototypes_fused.1} parent=1 // pred_region
      %s136 = ssub.s32 128, 128
      %137 = vsyncadd [#allocation4], %s136
      %s139 = sshll.u32 [#allocation5], 4
      %s140 = int_to_ptr.vmem [resolvable:$true] %s139
      %142 = dma.vmem_to_hbm [thread:$0]  %s140, 128, %s2, [#allocation4]
    $region17: #{_multi_prototypes_fused.1} parent=1 // pred_fallthru
      _
    // Predicated region
    $region18: #{_multi_prototypes_fused.1} parent=1 // pred_check
      _
    $region19: #{_multi_prototypes_fused.1} parent=1 // pred_check_branch
      %144 = sbr.rel (0) target = $region21
    $region20: #{_multi_prototypes_fused.1} parent=1 // pred_region
      %145 = dma.done [#allocation4], 128
    $region21: #{_multi_prototypes_fused.1} parent=1 // pred_fallthru
      _
    %146 = vsyncpa [#allocation3], 1
    %147 = vsyncpa [#allocation4], 1

</llo_original>
